<compile_context>
chip_gen: v7x
topology: tpu7x:2x2x1
jax: 0.10.0
libtpu: 0.0.40
codegen_flags: <defaults>
</compile_context>

<pallas_src>
import jax
import jax.numpy as jnp
from jax.experimental import pallas as pl
from jax.experimental.pallas import tpu as pltpu

EPS = 1e-5


def _mmd_resnet_kernel(slopes_ref,            # SMEM scalar-prefetch: (2*n_blocks,) PReLU slopes
                       x_ref,                 # (N, Dp) original input (resident)
                       w_ref,                 # (1, 2, Dp, Dp) pre-transposed weights (in, out)
                       gb_ref,                # (1, 4, Dp) packed [gamma1, beta1, gamma2, beta2]
                       out_ref):              # (N, Dp) output == resident running activation
    i = pl.program_id(0)
    n = pl.num_programs(0)

    @pl.when(i == 0)
    def _():
        out_ref[...] = x_ref[...]

    x = out_ref[...]                          # activation entering this ResnetBlock
    gb = gb_ref[0]                            # (4, Dp)
    a1 = slopes_ref[2 * i]
    a2 = slopes_ref[2 * i + 1]
    inv_n = jnp.float32(1.0 / x.shape[0])

    def linear_bn_prelu(h, w, g, bt, a):
        # Linear (bias omitted: cancelled exactly by batch-stat BatchNorm)
        y = jnp.dot(h.astype(w.dtype), w, preferred_element_type=jnp.float32)
        # BatchNorm1d, one-pass batch statistics (biased variance), folded into
        # a single per-feature scale/shift.
        mean = jnp.sum(y, axis=0, keepdims=True) * inv_n
        meansq = jnp.sum(y * y, axis=0, keepdims=True) * inv_n
        var = jnp.maximum(meansq - mean * mean, 0.0)
        s = g * jax.lax.rsqrt(var + EPS)       # (1, Dp)
        b = bt - mean * s                      # (1, Dp)
        y = y * s + b
        # PReLU with a single shared slope
        return jnp.where(y >= 0.0, y, a * y)

    h = linear_bn_prelu(x, w_ref[0, 0], gb[0:1], gb[1:2], a1)
    h = linear_bn_prelu(h, w_ref[0, 1], gb[2:3], gb[3:4], a2)

    res = x + h                                # inner residual of the ResnetBlock

    @pl.when(i < n - 1)
    def _():
        out_ref[...] = res

    @pl.when(i == n - 1)
    def _():
        # Outer residual of Mmd_resnet: input + model(input)
        out_ref[...] = res + x_ref[...]


def mmd_resnet_forward(x, params, *, weight_dtype=jnp.float32):
    N, D = x.shape
    n_blocks = params["w1"].shape[0]

    # --- layout plumbing in the wrapper (free / cheap XLA ops) ---------------
    # Pad the feature dim to a multiple of 128 for lane-dense tiles. Exact: all
    # padded weight rows/cols, gammas and betas are zero, so padded columns stay 0.
    Dp = ((D + 127) // 128) * 128
    pad = Dp - D
    xp = jnp.pad(x.astype(jnp.float32), ((0, 0), (0, pad))) if pad else x.astype(jnp.float32)

    # Pre-transpose weights to (in, out) and pack both layers of a block.
    wt1 = jnp.swapaxes(params["w1"], -1, -2)
    wt2 = jnp.swapaxes(params["w2"], -1, -2)
    if pad:
        wt1 = jnp.pad(wt1, ((0, 0), (0, pad), (0, pad)))
        wt2 = jnp.pad(wt2, ((0, 0), (0, pad), (0, pad)))
    w = jnp.stack([wt1, wt2], axis=1).astype(weight_dtype)       # (n_blocks, 2, Dp, Dp)

    # Pack gamma/beta of both layers (padded with zeros).
    gb = jnp.stack(
        [params["g1"], params["bt1"], params["g2"], params["bt2"]],
        axis=1).astype(jnp.float32)                              # (n_blocks, 4, D)
    if pad:
        gb = jnp.pad(gb, ((0, 0), (0, 0), (0, pad)))             # (n_blocks, 4, Dp)

    # PReLU slopes -> SMEM scalar prefetch.
    slopes = jnp.stack([params["a1"], params["a2"]],
                       axis=1).reshape(-1).astype(jnp.float32)   # (2*n_blocks,)

    wbytes = jnp.dtype(weight_dtype).itemsize
    flops = 2 * 2 * n_blocks * N * Dp * Dp
    bytes_accessed = (2 * n_blocks * Dp * Dp * wbytes   # weights
                      + n_blocks * 4 * Dp * 4           # gamma/beta
                      + 2 * N * Dp * 4)                 # x in + out
    cost = pl.CostEstimate(flops=flops, transcendentals=0,
                           bytes_accessed=bytes_accessed)

    # VMEM budget: resident x + out, double-buffered packed weights & vectors,
    # plus headroom for in-kernel (N, Dp) temporaries. Cap below physical VMEM.
    vmem_needed = (2 * N * Dp * 4
                   + 2 * 2 * Dp * Dp * wbytes
                   + 2 * 8 * Dp * 4
                   + 4 * N * Dp * 4)
    vmem_limit = int(min(max(2 * vmem_needed, 32 * 1024 * 1024),
                         100 * 1024 * 1024))

    w_spec = pl.BlockSpec((1, 2, Dp, Dp), lambda i, slopes: (i, 0, 0, 0))
    gb_spec = pl.BlockSpec((1, 4, Dp), lambda i, slopes: (i, 0, 0))
    act_spec = pl.BlockSpec((N, Dp), lambda i, slopes: (0, 0))

    grid_spec = pltpu.PrefetchScalarGridSpec(
        num_scalar_prefetch=1,
        grid=(n_blocks,),
        in_specs=[act_spec, w_spec, gb_spec],
        out_specs=act_spec,
    )

    out = pl.pallas_call(
        _mmd_resnet_kernel,
        out_shape=jax.ShapeDtypeStruct((N, Dp), jnp.float32),
        grid_spec=grid_spec,
        compiler_params=pltpu.CompilerParams(
            dimension_semantics=("arbitrary",),
            vmem_limit_bytes=vmem_limit),
        cost_estimate=cost,
    )(slopes, xp, w, gb)

    return out[:, :D] if pad else out


def init_params(key, n_blocks, dim):
    """PyTorch-default-style params (Linear weights in (out, in) layout)."""
    ks = jax.random.split(key, 4 * n_blocks)
    bound = 1.0 / jnp.sqrt(dim)
    w1 = jax.random.uniform(ks[0], (n_blocks, dim, dim), jnp.float32, -bound, bound)
    b1 = jax.random.uniform(ks[1], (n_blocks, dim), jnp.float32, -bound, bound)
    w2 = jax.random.uniform(ks[2], (n_blocks, dim, dim), jnp.float32, -bound, bound)
    b2 = jax.random.uniform(ks[3], (n_blocks, dim), jnp.float32, -bound, bound)
    return {
        "w1": w1, "b1": b1,
        "g1": jnp.ones((n_blocks, dim), jnp.float32),      # BN gamma init
        "bt1": jnp.zeros((n_blocks, dim), jnp.float32),    # BN beta init
        "a1": jnp.full((n_blocks,), 0.25, jnp.float32),    # PReLU init
        "w2": w2, "b2": b2,
        "g2": jnp.ones((n_blocks, dim), jnp.float32),
        "bt2": jnp.zeros((n_blocks, dim), jnp.float32),
        "a2": jnp.full((n_blocks,), 0.25, jnp.float32),
    }


def mmd_resnet_reference(x, params):
    """Pure-JAX reference mirroring the PyTorch forward (including the Linear
    bias, which the kernel legitimately drops since BN cancels it exactly)."""
    n_blocks = params["w1"].shape[0]

    def layer(h, w, b, g, bt, a):
        y = h @ w.T + b
        mean = y.mean(axis=0, keepdims=True)
        var = ((y - mean) ** 2).mean(axis=0, keepdims=True)
        y = (y - mean) / jnp.sqrt(var + EPS) * g + bt
        return jnp.where(y >= 0.0, y, a * y)

    out = x
    for i in range(n_blocks):
        h = layer(out, params["w1"][i], params["b1"][i],
                  params["g1"][i], params["bt1"][i], params["a1"][i])
        h = layer(h, params["w2"][i], params["b2"][i],
                  params["g2"][i], params["bt2"][i], params["a2"][i])
        out = out + h
    return x + out


if __name__ == "__main__":
    N, D, N_BLOCKS = 8, 32, 3
    key = jax.random.PRNGKey(0)
    k_x, k_p = jax.random.split(key)
    x = jax.random.normal(k_x, (N, D), jnp.float32)
    params = init_params(k_p, N_BLOCKS, D)

    ref = mmd_resnet_reference(x, params)

    # f32 weights: matches the PyTorch-semantics reference tightly.
    out = jax.block_until_ready(mmd_resnet_forward(x, params))
    assert out.shape == (N, D)
    assert jnp.allclose(out, ref, atol=1e-4, rtol=1e-4), "f32 kernel mismatch vs reference"

    # bf16-weight variant (halves weight HBM traffic, ~2x MXU throughput);
    # slight numeric drift vs the f32 reference is expected and accepted.
    out_bf16 = jax.block_until_ready(
        mmd_resnet_forward(x, params, weight_dtype=jnp.bfloat16))
    assert jnp.allclose(out_bf16, ref, atol=1e-1, rtol=1e-1), "bf16 kernel drift too large"

    print("KERNEL_OK")
</pallas_src>

<mosaic_0001>
module attributes {stable_mosaic.version = 11 : i64} {
  func.func @_mmd_resnet_kernel(%arg0: i32, %arg1: memref<6xf32, #tpu.memory_space<smem>>, %arg2: memref<8x128xf32, #tpu.memory_space<vmem>>, %arg3: memref<1x2x128x128xf32, #tpu.memory_space<vmem>>, %arg4: memref<1x4x128xf32, #tpu.memory_space<vmem>>, %arg5: memref<8x128xf32, #tpu.memory_space<vmem>>) attributes {dimension_semantics = [#tpu.dimension_semantics<arbitrary>], iteration_bounds = array<i64: 3>, scalar_prefetch = 1 : i64, scratch_operands = 0 : i64, tpu.core_type = #tpu.core_type<tc>, window_params = [{pipeline_mode = #tpu.pipeline_mode<synchronous>, transform_indices = @transform_0, window_bounds = array<i64: 8, 128>}, {transform_indices = @transform_1, window_bounds = array<i64: 1, 2, 128, 128>}, {transform_indices = @transform_2, window_bounds = array<i64: 1, 4, 128>}, {pipeline_mode = #tpu.pipeline_mode<synchronous>, transform_indices = @transform_3, window_bounds = array<i64: 8, 128>}]} {
    %c0_i32 = arith.constant 0 : i32
    %0 = arith.cmpi eq, %arg0, %c0_i32 : i32
    %1 = arith.extui %0 : i1 to i32
    %c0_i32_0 = arith.constant 0 : i32
    %2 = arith.cmpi ne, %1, %c0_i32_0 : i32
    scf.if %2 {
      %c0_32 = arith.constant 0 : index
      %c0_33 = arith.constant 0 : index
      %86 = vector.load %arg2[%c0_32, %c0_33] : memref<8x128xf32, #tpu.memory_space<vmem>>, vector<8x128xf32>
      %c0_34 = arith.constant 0 : index
      %c0_35 = arith.constant 0 : index
      %87 = vector.load %arg5[%c0_34, %c0_35] : memref<8x128xf32, #tpu.memory_space<vmem>>, vector<8x128xf32>
      tpu.vector_store %arg5[%c0_34, %c0_35], %86 {strides = array<i32>} : memref<8x128xf32, #tpu.memory_space<vmem>>, vector<8x128xf32>,
    } else {
    }
    %c0 = arith.constant 0 : index
    %c0_1 = arith.constant 0 : index
    %3 = vector.load %arg5[%c0, %c0_1] : memref<8x128xf32, #tpu.memory_space<vmem>>, vector<8x128xf32>
    %c0_2 = arith.constant 0 : index
    %c0_3 = arith.constant 0 : index
    %c0_4 = arith.constant 0 : index
    %4 = vector.load %arg4[%c0_2, %c0_3, %c0_4] : memref<1x4x128xf32, #tpu.memory_space<vmem>>, vector<1x4x128xf32>
    %5 = vector.shape_cast %4 : vector<1x4x128xf32> to vector<4x128xf32>
    %c2_i32 = arith.constant 2 : i32
    %6 = arith.muli %c2_i32, %arg0 : i32
    %7 = arith.index_cast %6 : i32 to index
    %8 = memref.load %arg1[%7] : memref<6xf32, #tpu.memory_space<smem>>
    %c2_i32_5 = arith.constant 2 : i32
    %9 = arith.muli %c2_i32_5, %arg0 : i32
    %c1_i32 = arith.constant 1 : i32
    %10 = arith.addi %9, %c1_i32 : i32
    %11 = arith.index_cast %10 : i32 to index
    %12 = memref.load %arg1[%11] : memref<6xf32, #tpu.memory_space<smem>>
    %c0_6 = arith.constant 0 : index
    %c0_7 = arith.constant 0 : index
    %c0_8 = arith.constant 0 : index
    %c0_9 = arith.constant 0 : index
    %13 = vector.load %arg3[%c0_6, %c0_7, %c0_8, %c0_9] : memref<1x2x128x128xf32, #tpu.memory_space<vmem>>, vector<1x1x128x128xf32>
    %14 = vector.shape_cast %13 : vector<1x1x128x128xf32> to vector<128x128xf32>
    %15 = vector.extract_strided_slice %5 {offsets = [0, 0], sizes = [1, 128], strides = [1, 1]} : vector<4x128xf32> to vector<1x128xf32>
    %16 = vector.extract_strided_slice %5 {offsets = [1, 0], sizes = [1, 128], strides = [1, 1]} : vector<4x128xf32> to vector<1x128xf32>
    %cst = arith.constant dense<0.000000e+00> : vector<8x128xf32>
    %17 = tpu.matmul %3, %14, %cst {dimension_numbers = #tpu.dot_dimension_numbers<[1], [0], [0], [1], [0, 0, 1, 1], [], []>} : vector<8x128xf32>, vector<128x128xf32>, vector<8x128xf32> -> vector<8x128xf32>
    %cst_10 = arith.constant dense<0.000000e+00> : vector<128xf32>
    %18 = vector.multi_reduction <add>, %17, %cst_10 [0] : vector<8x128xf32> to vector<128xf32>
    %19 = vector.shape_cast %18 : vector<128xf32> to vector<1x128xf32>
    %cst_11 = arith.constant 1.250000e-01 : f32
    %20 = vector.broadcast %cst_11 : f32 to vector<1x128xf32>
    %21 = arith.mulf %19, %20 : vector<1x128xf32>
    %22 = arith.mulf %17, %17 : vector<8x128xf32>
    %cst_12 = arith.constant dense<0.000000e+00> : vector<128xf32>
    %23 = vector.multi_reduction <add>, %22, %cst_12 [0] : vector<8x128xf32> to vector<128xf32>
    %24 = vector.shape_cast %23 : vector<128xf32> to vector<1x128xf32>
    %cst_13 = arith.constant 1.250000e-01 : f32
    %25 = vector.broadcast %cst_13 : f32 to vector<1x128xf32>
    %26 = arith.mulf %24, %25 : vector<1x128xf32>
    %27 = arith.mulf %21, %21 : vector<1x128xf32>
    %28 = arith.subf %26, %27 : vector<1x128xf32>
    %cst_14 = arith.constant 0.000000e+00 : f32
    %29 = vector.broadcast %cst_14 : f32 to vector<1x128xf32>
    %30 = arith.maximumf %28, %29 : vector<1x128xf32>
    %cst_15 = arith.constant 9.99999974E-6 : f32
    %31 = vector.broadcast %cst_15 : f32 to vector<1x128xf32>
    %32 = arith.addf %30, %31 : vector<1x128xf32>
    %33 = math.rsqrt %32 : vector<1x128xf32>
    %34 = arith.mulf %15, %33 : vector<1x128xf32>
    %35 = arith.mulf %21, %34 : vector<1x128xf32>
    %36 = arith.subf %16, %35 : vector<1x128xf32>
    %37 = vector.broadcast %34 : vector<1x128xf32> to vector<8x128xf32>
    %38 = arith.mulf %17, %37 : vector<8x128xf32>
    %39 = vector.broadcast %36 : vector<1x128xf32> to vector<8x128xf32>
    %40 = arith.addf %38, %39 : vector<8x128xf32>
    %cst_16 = arith.constant 0.000000e+00 : f32
    %41 = vector.broadcast %cst_16 : f32 to vector<8x128xf32>
    %42 = arith.cmpf oge, %40, %41 : vector<8x128xf32>
    %43 = vector.broadcast %8 : f32 to vector<8x128xf32>
    %44 = arith.mulf %43, %40 : vector<8x128xf32>
    %45 = arith.select %42, %40, %44 : vector<8x128xi1>, vector<8x128xf32>
    %c0_17 = arith.constant 0 : index
    %c1 = arith.constant 1 : index
    %c0_18 = arith.constant 0 : index
    %c0_19 = arith.constant 0 : index
    %46 = vector.load %arg3[%c0_17, %c1, %c0_18, %c0_19] : memref<1x2x128x128xf32, #tpu.memory_space<vmem>>, vector<1x1x128x128xf32>
    %47 = vector.shape_cast %46 : vector<1x1x128x128xf32> to vector<128x128xf32>
    %48 = vector.extract_strided_slice %5 {offsets = [2, 0], sizes = [1, 128], strides = [1, 1]} : vector<4x128xf32> to vector<1x128xf32>
    %49 = vector.extract_strided_slice %5 {offsets = [3, 0], sizes = [1, 128], strides = [1, 1]} : vector<4x128xf32> to vector<1x128xf32>
    %cst_20 = arith.constant dense<0.000000e+00> : vector<8x128xf32>
    %50 = tpu.matmul %45, %47, %cst_20 {dimension_numbers = #tpu.dot_dimension_numbers<[1], [0], [0], [1], [0, 0, 1, 1], [], []>} : vector<8x128xf32>, vector<128x128xf32>, vector<8x128xf32> -> vector<8x128xf32>
    %cst_21 = arith.constant dense<0.000000e+00> : vector<128xf32>
    %51 = vector.multi_reduction <add>, %50, %cst_21 [0] : vector<8x128xf32> to vector<128xf32>
    %52 = vector.shape_cast %51 : vector<128xf32> to vector<1x128xf32>
    %cst_22 = arith.constant 1.250000e-01 : f32
    %53 = vector.broadcast %cst_22 : f32 to vector<1x128xf32>
    %54 = arith.mulf %52, %53 : vector<1x128xf32>
    %55 = arith.mulf %50, %50 : vector<8x128xf32>
    %cst_23 = arith.constant dense<0.000000e+00> : vector<128xf32>
    %56 = vector.multi_reduction <add>, %55, %cst_23 [0] : vector<8x128xf32> to vector<128xf32>
    %57 = vector.shape_cast %56 : vector<128xf32> to vector<1x128xf32>
    %cst_24 = arith.constant 1.250000e-01 : f32
    %58 = vector.broadcast %cst_24 : f32 to vector<1x128xf32>
    %59 = arith.mulf %57, %58 : vector<1x128xf32>
    %60 = arith.mulf %54, %54 : vector<1x128xf32>
    %61 = arith.subf %59, %60 : vector<1x128xf32>
    %cst_25 = arith.constant 0.000000e+00 : f32
    %62 = vector.broadcast %cst_25 : f32 to vector<1x128xf32>
    %63 = arith.maximumf %61, %62 : vector<1x128xf32>
    %cst_26 = arith.constant 9.99999974E-6 : f32
    %64 = vector.broadcast %cst_26 : f32 to vector<1x128xf32>
    %65 = arith.addf %63, %64 : vector<1x128xf32>
    %66 = math.rsqrt %65 : vector<1x128xf32>
    %67 = arith.mulf %48, %66 : vector<1x128xf32>
    %68 = arith.mulf %54, %67 : vector<1x128xf32>
    %69 = arith.subf %49, %68 : vector<1x128xf32>
    %70 = vector.broadcast %67 : vector<1x128xf32> to vector<8x128xf32>
    %71 = arith.mulf %50, %70 : vector<8x128xf32>
    %72 = vector.broadcast %69 : vector<1x128xf32> to vector<8x128xf32>
    %73 = arith.addf %71, %72 : vector<8x128xf32>
    %cst_27 = arith.constant 0.000000e+00 : f32
    %74 = vector.broadcast %cst_27 : f32 to vector<8x128xf32>
    %75 = arith.cmpf oge, %73, %74 : vector<8x128xf32>
    %76 = vector.broadcast %12 : f32 to vector<8x128xf32>
    %77 = arith.mulf %76, %73 : vector<8x128xf32>
    %78 = arith.select %75, %73, %77 : vector<8x128xi1>, vector<8x128xf32>
    %79 = arith.addf %3, %78 : vector<8x128xf32>
    %c2_i32_28 = arith.constant 2 : i32
    %80 = arith.cmpi slt, %arg0, %c2_i32_28 : i32
    %81 = arith.extui %80 : i1 to i32
    %c0_i32_29 = arith.constant 0 : i32
    %82 = arith.cmpi ne, %81, %c0_i32_29 : i32
    scf.if %82 {
      %c0_32 = arith.constant 0 : index
      %c0_33 = arith.constant 0 : index
      %86 = vector.load %arg5[%c0_32, %c0_33] : memref<8x128xf32, #tpu.memory_space<vmem>>, vector<8x128xf32>
      tpu.vector_store %arg5[%c0_32, %c0_33], %79 {strides = array<i32>} : memref<8x128xf32, #tpu.memory_space<vmem>>, vector<8x128xf32>,
    } else {
    }
    %c2_i32_30 = arith.constant 2 : i32
    %83 = arith.cmpi eq, %arg0, %c2_i32_30 : i32
    %84 = arith.extui %83 : i1 to i32
    %c0_i32_31 = arith.constant 0 : i32
    %85 = arith.cmpi ne, %84, %c0_i32_31 : i32
    scf.if %85 {
      %c0_32 = arith.constant 0 : index
      %c0_33 = arith.constant 0 : index
      %86 = vector.load %arg2[%c0_32, %c0_33] : memref<8x128xf32, #tpu.memory_space<vmem>>, vector<8x128xf32>
      %87 = arith.addf %79, %86 : vector<8x128xf32>
      %c0_34 = arith.constant 0 : index
      %c0_35 = arith.constant 0 : index
      %88 = vector.load %arg5[%c0_34, %c0_35] : memref<8x128xf32, #tpu.memory_space<vmem>>, vector<8x128xf32>
      tpu.vector_store %arg5[%c0_34, %c0_35], %87 {strides = array<i32>} : memref<8x128xf32, #tpu.memory_space<vmem>>, vector<8x128xf32>,
    } else {
    }
    return
  }
  func.func @transform_0(%arg0: i32, %arg1: memref<6xf32, #tpu.memory_space<smem>>) -> (i32, i32) {
    %c0_i32 = arith.constant 0 : i32
    %c0_i32_0 = arith.constant 0 : i32
    %c0_i32_1 = arith.constant 0 : i32
    return %c0_i32, %c0_i32_0 : i32, i32
  }
  func.func @transform_1(%arg0: i32, %arg1: memref<6xf32, #tpu.memory_space<smem>>) -> (i32, i32, i32, i32) {
    %c0_i32 = arith.constant 0 : i32
    %c0_i32_0 = arith.constant 0 : i32
    %c0_i32_1 = arith.constant 0 : i32
    %c0_i32_2 = arith.constant 0 : i32
    return %arg0, %c0_i32, %c0_i32_0, %c0_i32_1 : i32, i32, i32, i32
  }
  func.func @transform_2(%arg0: i32, %arg1: memref<6xf32, #tpu.memory_space<smem>>) -> (i32, i32, i32) {
    %c0_i32 = arith.constant 0 : i32
    %c0_i32_0 = arith.constant 0 : i32
    %c0_i32_1 = arith.constant 0 : i32
    return %arg0, %c0_i32, %c0_i32_0 : i32, i32, i32
  }
  func.func @transform_3(%arg0: i32, %arg1: memref<6xf32, #tpu.memory_space<smem>>) -> (i32, i32) {
    %c0_i32 = arith.constant 0 : i32
    %c0_i32_0 = arith.constant 0 : i32
    %c0_i32_1 = arith.constant 0 : i32
    return %c0_i32, %c0_i32_0 : i32, i32
  }
}

</mosaic_0001>

<llo_original>
// kernel: tpu_custom_call.1
$region0: #{tpu_custom_call.1}
  #allocation0 [shape = 'u32[]', space=smem, size = 0x4, offset = 0x4, fixed_abs, tag = 'smem constant byte address 0x4 - core index']
  #allocation1 [shape = 'u32[144,128]{1,0:T(1,128)}', space=vmem, size = 0x12000, scoped, tag = 'internal scratch']
  #allocation2 [shape = 's32[1]{0}', space=sflag, size = 0x4, scoped, tag = 'scoped memory for tpu_custom_call.1']
  #allocation3 [shape = 'u8[512]{0}', space=smem, size = 0x200, scoped, tag = 'prefetched SMEM operand 0']
  %s0 = inlined_call_operand.hbm [shape: f32[6], index: 0, kind: input, shape index: {}]
  %s1 = inlined_call_operand.hbm [shape: f32[8,128], index: 1, kind: input, shape index: {}]
  %s2 = inlined_call_operand.hbm [shape: f32[3,2,128,128], index: 2, kind: input, shape index: {}]
  %s3 = inlined_call_operand.hbm [shape: f32[3,4,128], index: 3, kind: input, shape index: {}]
  %s4 = inlined_call_operand.hbm [shape: f32[8,128], index: 4, kind: output, shape index: {}]
  %s5 = sld [smem:[#allocation0]]
  $region69: #{tpu_custom_call.1} parent=0
    _
  %s7 = ssub.s32 1, %s5
  %s8 = scalar_select 0, %s7, %s5
  %10 = dma.hbm_to_smem %s0, 16, [#allocation3], [#allocation2]
  %11 = dma.done [#allocation2], 16
  %12 = sfence
  $region1: #{tpu_custom_call.1} parent=0
    #allocation4 [shape = 'u8[4096]{0}', space=vmem, size = 0x1000, scoped, tag = 'input window, operand 1, single buffered']
    #allocation5 [shape = 's32[2]{0}', space=sflag, size = 0x8, scoped, tag = 'scoped memory for tpu_custom_call.1']
    #allocation6 [shape = 's32[2]{0}', space=sflag, size = 0x8, scoped, tag = 'scoped memory for tpu_custom_call.1']
    #allocation7 [shape = 'u8[262144]{0}', space=vmem, size = 0x40000, scoped, tag = 'input window, operand 2']
    #allocation8 [shape = 's32[2]{0}', space=sflag, size = 0x8, scoped, tag = 'scoped memory for tpu_custom_call.1']
    #allocation9 [shape = 'u8[4096]{0}', space=vmem, size = 0x1000, scoped, tag = 'input window, operand 3']
    #allocation10 [shape = 'u8[4096]{0}', space=vmem, size = 0x1000, scoped, tag = 'output window, operand 0, single buffered']
    %13 = vsyncpa [#allocation5], 0
    %14 = vsyncpa [#allocation8], 0
    %s15 = scalar_lea.sflag [#allocation8], 1
    %16 = vsyncpa %s15, 0
    %17 = vsyncpa [#allocation6], 0
    loop: start=0, step=1, limit=5
    $region2: #{tpu_custom_call.1} parent=1 // loop_pre_header
      _
    $region3: #{tpu_custom_call.1} parent=1 // loop_header
      %s19 = sphi 0, %s23
      %p20 = scmp.ge.s32.totalorder %s19, 5
      %s27 = sphi 0, %s27
      %s29 = sphi 0, %s27
      %s30 = sphi 0, %s29
      %s44 = sphi 0, %s30
      %s50 = sphi 0, %s52
      %s53 = sphi 0, %s50
      %s54 = sphi 0, %s53
      %s70 = sphi 0, %s54
      %s76 = sphi 0, %s78
      %s79 = sphi 0, %s76
      %s80 = sphi 0, %s79
      %s96 = sphi 0, %s80
      %s100 = sphi 0, %s100
      %s102 = sphi 0, %s100
      %s103 = sphi 0, %s102
      %s117 = sphi 0, %s103
    $region4: #{tpu_custom_call.1} parent=1 // loop_header_branch
      %22 = sbr.rel (%p20) target = $region8
    $region5: #{tpu_custom_call.1} parent=1 // loop_body
      %s24 = ssub.s32 %s19, 1
      %s25 = ssub.s32 %s19, 2
      %s26 = sadd.s32 %s19, 1
      %s28 = sadd.s32 %s27, 1
      %p31 = scmp.eq.s32.totalorder %s19, 2
      %p32 = scmp.ne.s32.totalorder %s27, %s29
      %p33 = scmp.eq.s32.totalorder %s19, 0
      %p34 = por %p32, %p33
      %p35 = scmp.ne.s32.totalorder %s27, %s29
      %p36 = scmp.eq.s32.totalorder %s24, 2
      %p37 = por %p35, %p36
      %p38 = scmp.ne.s32.totalorder %s29, %s30
      %p39 = scmp.eq.s32.totalorder %s24, 0
      %p40 = por %p38, %p39
      %p41 = scmp.ne.s32.totalorder %s29, %s30
      %p42 = scmp.eq.s32.totalorder %s25, 2
      %p43 = por %p41, %p42
      %p45 = scmp.ne.s32.totalorder %s30, %s44
      %p46 = scmp.eq.s32.totalorder %s25, 0
      %p47 = por %p45, %p46
      %s48 = ssub.s32 %s19, %s26
      %p49 = scmp.eq.s32.totalorder %s48, 0
      %s51 = sadd.s32 %s50, 1
      %s52 = scalar_select %p49, %s50, %s51
      %p55 = pneg %p49
      %p56 = scmp.eq.s32.totalorder %s19, 2
      %p57 = por %p55, %p56
      %p58 = scmp.ne.s32.totalorder %s50, %s53
      %p59 = scmp.eq.s32.totalorder %s19, 0
      %p60 = por %p58, %p59
      %p61 = scmp.ne.s32.totalorder %s50, %s53
      %p62 = scmp.eq.s32.totalorder %s24, 2
      %p63 = por %p61, %p62
      %p64 = scmp.ne.s32.totalorder %s53, %s54
      %p65 = scmp.eq.s32.totalorder %s24, 0
      %p66 = por %p64, %p65
      %p67 = scmp.ne.s32.totalorder %s53, %s54
      %p68 = scmp.eq.s32.totalorder %s25, 2
      %p69 = por %p67, %p68
      %p71 = scmp.ne.s32.totalorder %s54, %s70
      %p72 = scmp.eq.s32.totalorder %s25, 0
      %p73 = por %p71, %p72
      %s74 = ssub.s32 %s19, %s26
      %p75 = scmp.eq.s32.totalorder %s74, 0
      %s77 = sadd.s32 %s76, 1
      %s78 = scalar_select %p75, %s76, %s77
      %p81 = pneg %p75
      %p82 = scmp.eq.s32.totalorder %s19, 2
      %p83 = por %p81, %p82
      %p84 = scmp.ne.s32.totalorder %s76, %s79
      %p85 = scmp.eq.s32.totalorder %s19, 0
      %p86 = por %p84, %p85
      %p87 = scmp.ne.s32.totalorder %s76, %s79
      %p88 = scmp.eq.s32.totalorder %s24, 2
      %p89 = por %p87, %p88
      %p90 = scmp.ne.s32.totalorder %s79, %s80
      %p91 = scmp.eq.s32.totalorder %s24, 0
      %p92 = por %p90, %p91
      %p93 = scmp.ne.s32.totalorder %s79, %s80
      %p94 = scmp.eq.s32.totalorder %s25, 2
      %p95 = por %p93, %p94
      %p97 = scmp.ne.s32.totalorder %s80, %s96
      %p98 = scmp.eq.s32.totalorder %s25, 0
      %p99 = por %p97, %p98
      %s101 = sadd.s32 %s100, 1
      %p104 = scmp.eq.s32.totalorder %s19, 2
      %p105 = scmp.ne.s32.totalorder %s100, %s102
      %p106 = scmp.eq.s32.totalorder %s19, 0
      %p107 = por %p105, %p106
      %p108 = scmp.ne.s32.totalorder %s100, %s102
      %p109 = scmp.eq.s32.totalorder %s24, 2
      %p110 = por %p108, %p109
      %p111 = scmp.ne.s32.totalorder %s102, %s103
      %p112 = scmp.eq.s32.totalorder %s24, 0
      %p113 = por %p111, %p112
      %p114 = scmp.ne.s32.totalorder %s102, %s103
      %p115 = scmp.eq.s32.totalorder %s25, 2
      %p116 = por %p114, %p115
      %p118 = scmp.ne.s32.totalorder %s103, %s117
      %p119 = scmp.eq.s32.totalorder %s25, 0
      %p120 = por %p118, %p119
      %p121 = scmp.le.s32.totalorder 1, %s19
      %p122 = scmp.lt.s32.totalorder %s19, 4
      %p123 = pnand %p121, %p122
      %p124 = pneg %p123
      // Predicated region
      $region9: #{tpu_custom_call.1} parent=5 // pred_check
        _
      $region10: #{tpu_custom_call.1} parent=5 // pred_check_branch
        %126 = sbr.rel (%p123) target = $region12
      $region11: #{tpu_custom_call.1} parent=5 // pred_region
        %s127 = ssub.s32 %s19, 1
        // Predicated region
        $region13: #{tpu_custom_call.1} parent=11 // pred_check
          %p128 = pneg %p40
        $region14: #{tpu_custom_call.1} parent=11 // pred_check_branch
          %130 = sbr.rel (%p128) target = $region16
        $region15: #{tpu_custom_call.1} parent=11 // pred_region
          %s132 = ssub.s32 128, 128
          %133 = vsyncadd [#allocation5], %s132
          %s135 = sshll.u32 [#allocation4], 4
          %s136 = int_to_ptr.vmem [resolvable:$true] %s135
          %138 = dma.hbm_to_vmem [thread:$0]  %s1, 128, %s136, [#allocation5]
        $region16: #{tpu_custom_call.1} parent=11 // pred_fallthru
          _
      $region12: #{tpu_custom_call.1} parent=5 // pred_fallthru
        _
      %p139 = scmp.lt.s32.totalorder %s19, 3
      // Predicated region
      $region17: #{tpu_custom_call.1} parent=5 // pred_check
        %p140 = pneg %p139
      $region18: #{tpu_custom_call.1} parent=5 // pred_check_branch
        %142 = sbr.rel (%p140) target = $region20
      $region19: #{tpu_custom_call.1} parent=5 // pred_region
        // Predicated region
        $region21: #{tpu_custom_call.1} parent=19 // pred_check
          %p143 = pneg %p60
        $region22: #{tpu_custom_call.1} parent=19 // pred_check_branch
          %145 = sbr.rel (%p143) target = $region24
        $region23: #{tpu_custom_call.1} parent=19 // pred_region
          %s146 = sand.u32 %s19, 1
          %s147 = scalar_lea.sflag [#allocation8], %s146
          %s148 = sand.u32 %s50, 1
          %s149 = smul.addr %s148, 256
          %s150 = scalar_lea.vmem [#allocation7], %s149
          %s152 = ssub.s32 4096, 4096
          %153 = vsyncadd %s147, %s152
          %s154 = smul.addr %s19, 32
          %s155 = smul.addr %s154, 128
          %s156 = scalar_lea.hbm %s2, %s155
          %s157 = sshll.u32 %s150, 4
          %s158 = int_to_ptr.vmem [resolvable:$true] %s157
          %163 = dma.hbm_to_vmem [thread:$0]  %s156, 4096, %s158, %s147, 128, 128, 8
        $region24: #{tpu_custom_call.1} parent=19 // pred_fallthru
          _
        // Predicated region
        $region25: #{tpu_custom_call.1} parent=19 // pred_check
          %p164 = pneg %p86
        $region26: #{tpu_custom_call.1} parent=19 // pred_check_branch
          %166 = sbr.rel (%p164) target = $region28
        $region27: #{tpu_custom_call.1} parent=19 // pred_region
          %s167 = sand.u32 %s19, 1
          %s168 = scalar_lea.sflag [#allocation8], %s167
          %s169 = sand.u32 %s76, 1
          %s170 = smul.addr %s169, 4
          %s171 = scalar_lea.vmem [#allocation9], %s170
          %s173 = ssub.s32 64, 64
          %174 = vsyncadd %s168, %s173
          %s175 = smul.addr %s19, 64
          %s176 = scalar_lea.hbm %s3, %s175
          %s178 = sshll.u32 %s171, 4
          %s179 = int_to_ptr.vmem [resolvable:$true] %s178
          %181 = dma.hbm_to_vmem [thread:$0]  %s176, 64, %s179, %s168
        $region28: #{tpu_custom_call.1} parent=19 // pred_fallthru
          _
      $region20: #{tpu_custom_call.1} parent=5 // pred_fallthru
        _
      %p182 = scmp.le.s32.totalorder 1, %s19
      %p183 = scmp.lt.s32.totalorder %s19, 4
      %p184 = pnand %p182, %p183
      %p185 = pneg %p184
      // Predicated region
      $region29: #{tpu_custom_call.1} parent=5 // pred_check
        _
      $region30: #{tpu_custom_call.1} parent=5 // pred_check_branch
        %187 = sbr.rel (%p184) target = $region32
      $region31: #{tpu_custom_call.1} parent=5 // pred_region
        %s188 = ssub.s32 %s19, 1
        // Predicated region
        $region33: #{tpu_custom_call.1} parent=31 // pred_check
          %p189 = pneg %p40
        $region34: #{tpu_custom_call.1} parent=31 // pred_check_branch
          %191 = sbr.rel (%p189) target = $region36
        $region35: #{tpu_custom_call.1} parent=31 // pred_region
          %192 = dma.done [#allocation5], 128
        $region36: #{tpu_custom_call.1} parent=31 // pred_fallthru
          _
        %s193 = sand.u32 %s24, 1
        %s194 = scalar_lea.sflag [#allocation8], %s193
        %s195 = sand.u32 %s53, 1
        %s196 = smul.addr %s195, 256
        %s197 = scalar_lea.vmem [#allocation7], %s196
        // Predicated region
        $region37: #{tpu_custom_call.1} parent=31 // pred_check
          %p198 = pneg %p66
        $region38: #{tpu_custom_call.1} parent=31 // pred_check_branch
          %200 = sbr.rel (%p198) target = $region40
        $region39: #{tpu_custom_call.1} parent=31 // pred_region
          %201 = dma.done %s194, 4096
        $region40: #{tpu_custom_call.1} parent=31 // pred_fallthru
          _
        %s202 = sand.u32 %s24, 1
        %s203 = scalar_lea.sflag [#allocation8], %s202
        %s204 = sand.u32 %s79, 1
        %s205 = smul.addr %s204, 4
        %s206 = scalar_lea.vmem [#allocation9], %s205
        // Predicated region
        $region41: #{tpu_custom_call.1} parent=31 // pred_check
          %p207 = pneg %p92
        $region42: #{tpu_custom_call.1} parent=31 // pred_check_branch
          %209 = sbr.rel (%p207) target = $region44
        $region43: #{tpu_custom_call.1} parent=31 // pred_region
          %210 = dma.done %s203, 64
        $region44: #{tpu_custom_call.1} parent=31 // pred_fallthru
          _
        %p211 = pneg %p40
        %p212 = pneg %p37
        %s213 = sand.u32 %s24, 1
        %s214 = scalar_lea.sflag [#allocation8], %s213
        %s215 = sand.u32 %s53, 1
        %s216 = smul.addr %s215, 256
        %s217 = scalar_lea.vmem [#allocation7], %s216
        %p218 = pneg %p66
        %p219 = pneg %p63
        %s220 = sand.u32 %s24, 1
        %s221 = scalar_lea.sflag [#allocation8], %s220
        %s222 = sand.u32 %s79, 1
        %s223 = smul.addr %s222, 4
        %s224 = scalar_lea.vmem [#allocation9], %s223
        %p225 = pneg %p92
        %p226 = pneg %p89
        %p227 = pneg %p113
        %p228 = pneg %p110
        %p229 = scmp.eq.s32.totalorder %s24, 0
        // Predicated region
        $region45: #{tpu_custom_call.1} parent=31 // pred_check
          %p230 = pneg %p229
        $region46: #{tpu_custom_call.1} parent=31 // pred_check_branch
          %232 = sbr.rel (%p230) target = $region48
        $region47: #{tpu_custom_call.1} parent=31 // pred_region
          %v233 = vld [vmem:[#allocation4] sm:$0xff]
          %234 = vst [vmem:[#allocation10] sm:$0xff] %v233
        $region48: #{tpu_custom_call.1} parent=31 // pred_fallthru
          _
        %v235 = vld [vmem:[#allocation10] sm:$0xff]
        %v236 = vld [vmem:[%s206] sm:$0xf]
        %s237 = smul.u32 %s24, 2
        %s238 = sld [smem:[#allocation3 + %s237]]
        %s239 = sadd.s32 %s237, 1
        %s240 = sld [smem:[#allocation3 + %s239]]
        %v241 = vld [vmem:[%s197] sm:$0xff]
        %v242 = vld [vmem:[%s197 + $0x8] sm:$0xff]
        %v243 = vld [vmem:[%s197 + $0x10] sm:$0xff]
        %v244 = vld [vmem:[%s197 + $0x18] sm:$0xff]
        %v245 = vld [vmem:[%s197 + $0x20] sm:$0xff]
        %v246 = vld [vmem:[%s197 + $0x28] sm:$0xff]
        %v247 = vld [vmem:[%s197 + $0x30] sm:$0xff]
        %v248 = vld [vmem:[%s197 + $0x38] sm:$0xff]
        %v249 = vld [vmem:[%s197 + $0x40] sm:$0xff]
        %v250 = vld [vmem:[%s197 + $0x48] sm:$0xff]
        %v251 = vld [vmem:[%s197 + $0x50] sm:$0xff]
        %v252 = vld [vmem:[%s197 + $0x58] sm:$0xff]
        %v253 = vld [vmem:[%s197 + $0x60] sm:$0xff]
        %v254 = vld [vmem:[%s197 + $0x68] sm:$0xff]
        %v255 = vld [vmem:[%s197 + $0x70] sm:$0xff]
        %v256 = vld [vmem:[%s197 + $0x78] sm:$0xff]
        %257 = vmatprep.subr.mxu0 0.0
        %258 = vmatpush1.msra.mxu0 %v241
        %259 = vmatprep.subr.mxu0 0.0
        %260 = vmatpush1.msra.mxu0 %v242
        %261 = vmatprep.subr.mxu0 0.0
        %262 = vmatpush1.msra.mxu0 %v243
        %263 = vmatprep.subr.mxu0 0.0
        %264 = vmatpush1.msra.mxu0 %v244
        %265 = vmatprep.subr.mxu0 0.0
        %266 = vmatpush1.msra.mxu0 %v245
        %267 = vmatprep.subr.mxu0 0.0
        %268 = vmatpush1.msra.mxu0 %v246
        %269 = vmatprep.subr.mxu0 0.0
        %270 = vmatpush1.msra.mxu0 %v247
        %271 = vmatprep.subr.mxu0 0.0
        %272 = vmatpush1.msra.mxu0 %v248
        %273 = vmatprep.subr.mxu0 0.0
        %274 = vmatpush1.msra.mxu0 %v249
        %275 = vmatprep.subr.mxu0 0.0
        %276 = vmatpush1.msra.mxu0 %v250
        %277 = vmatprep.subr.mxu0 0.0
        %278 = vmatpush1.msra.mxu0 %v251
        %279 = vmatprep.subr.mxu0 0.0
        %280 = vmatpush1.msra.mxu0 %v252
        %281 = vmatprep.subr.mxu0 0.0
        %282 = vmatpush1.msra.mxu0 %v253
        %283 = vmatprep.subr.mxu0 0.0
        %284 = vmatpush1.msra.mxu0 %v254
        %285 = vmatprep.subr.mxu0 0.0
        %286 = vmatpush1.msra.mxu0 %v255
        %287 = vmatprep.subr.mxu0 0.0
        %288 = vmatpush1.msra.mxu0 %v256
        %289 = vmatprep.subr.mxu0 0.0
        %290 = vmatpush1.msra.mxu0 0.0
        %291 = vmatprep.subr.mxu0 0.0
        %292 = vmatpush1.msra.mxu0 0.0
        %293 = vmatprep.subr.mxu0 0.0
        %294 = vmatpush1.msra.mxu0 0.0
        %295 = vmatprep.subr.mxu0 0.0
        %296 = vmatpush1.msra.mxu0 0.0
        %297 = vmatprep.subr.mxu0 0.0
        %298 = vmatpush1.msra.mxu0 0.0
        %299 = vmatprep.subr.mxu0 0.0
        %300 = vmatpush1.msra.mxu0 0.0
        %301 = vmatprep.subr.mxu0 0.0
        %302 = vmatpush1.msra.mxu0 0.0
        %303 = vmatprep.subr.mxu0 0.0
        %304 = vmatpush1.msra.mxu0 0.0
        %305 = vmatprep.subr.mxu0 0.0
        %306 = vmatpush1.msra.mxu0 0.0
        %307 = vmatprep.subr.mxu0 0.0
        %308 = vmatpush1.msra.mxu0 0.0
        %309 = vmatprep.subr.mxu0 0.0
        %310 = vmatpush1.msra.mxu0 0.0
        %311 = vmatprep.subr.mxu0 0.0
        %312 = vmatpush1.msra.mxu0 0.0
        %313 = vmatprep.subr.mxu0 0.0
        %314 = vmatpush1.msra.mxu0 0.0
        %315 = vmatprep.subr.mxu0 0.0
        %316 = vmatpush1.msra.mxu0 0.0
        %317 = vmatprep.subr.mxu0 0.0
        %318 = vmatpush1.msra.mxu0 0.0
        %319 = vmatprep.subr.mxu0 0.0
        %320 = vmatpush1.msra.mxu0 0.0
        %321 = vmatprep.mubr.f32.mxu0 0.0
        %322 = vmatmul.mubr.f32.gmra.mrb[0].mxu0 %v235
        %v323 = vpop.f32.mrb[0].mxu0
        %v324 = vadd.f32 0.0, %v323
        %v325 = vpop.f32.mrb[0].mxu0
        %326 = vdwg.mxu0
        %v327 = vrot.slane %v324, 4
        %v328 = vadd.f32 %v324, %v327
        %v329 = vrot.slane %v328, 2
        %v330 = vadd.f32 %v328, %v329
        %v331 = vrot.slane %v330, 1
        %v332 = vadd.f32 %v330, %v331
        %v333 = vmul.f32 %v332, 0.125
        %v334 = vmul.f32 %v324, %v324
        %v335 = vrot.slane %v334, 4
        %v336 = vadd.f32 %v334, %v335
        %v337 = vrot.slane %v336, 2
        %v338 = vadd.f32 %v336, %v337
        %v339 = vrot.slane %v338, 1
        %v340 = vadd.f32 %v338, %v339
        %v341 = vmul.f32 %v340, 0.125
        %v342 = vmul.f32 %v333, %v333
        %v343 = vsub.f32 %v341, %v342
        %v344 = vmax.f32 %v343, 0.0
        %v345 = vadd.f32 %v344, 1e-05
        %v346 = vrsqrt.pop %v345
        %v347 = vmul.f32 %v236, %v346
        %v348 = vmul.f32 %v333, %v347
        %v350 = vrot.slane %v348, 7
        %v352 = vsub.f32 %v236, %v350
        %v353 = vlaneseq
        %v354 = vshrl.u32 %v353, 7
        %v355 = vsub.s32 0, %v354
        %v356 = vrot.slane %v347, %v355
        %v357 = vmul.f32 %v324, %v356
        %v358 = vlaneseq
        %v359 = vshrl.u32 %v358, 7
        %v360 = vsub.s32 1, %v359
        %v361 = vrot.slane %v352, %v360
        %v362 = vadd.f32 %v357, %v361
        %vm363 = vcmp.ge.f32.partialorder %v362, 0.0
        %v364 = vstv %s238
        %v365 = vmul.f32 %v364, %v362
        %v366 = vsel %vm363, %v362, %v365
        %s367 = scalar_lea.vmem %s197, 128 [#allocation7]
        %v368 = vld [vmem:[%s367] sm:$0xff]
        %v369 = vld [vmem:[%s367 + $0x8] sm:$0xff]
        %v370 = vld [vmem:[%s367 + $0x10] sm:$0xff]
        %v371 = vld [vmem:[%s367 + $0x18] sm:$0xff]
        %v372 = vld [vmem:[%s367 + $0x20] sm:$0xff]
        %v373 = vld [vmem:[%s367 + $0x28] sm:$0xff]
        %v374 = vld [vmem:[%s367 + $0x30] sm:$0xff]
        %v375 = vld [vmem:[%s367 + $0x38] sm:$0xff]
        %v376 = vld [vmem:[%s367 + $0x40] sm:$0xff]
        %v377 = vld [vmem:[%s367 + $0x48] sm:$0xff]
        %v378 = vld [vmem:[%s367 + $0x50] sm:$0xff]
        %v379 = vld [vmem:[%s367 + $0x58] sm:$0xff]
        %v380 = vld [vmem:[%s367 + $0x60] sm:$0xff]
        %v381 = vld [vmem:[%s367 + $0x68] sm:$0xff]
        %v382 = vld [vmem:[%s367 + $0x70] sm:$0xff]
        %v383 = vld [vmem:[%s367 + $0x78] sm:$0xff]
        %384 = vmatprep.subr.mxu0 0.0
        %385 = vmatpush1.msra.mxu0 %v368
        %386 = vmatprep.subr.mxu0 0.0
        %387 = vmatpush1.msra.mxu0 %v369
        %388 = vmatprep.subr.mxu0 0.0
        %389 = vmatpush1.msra.mxu0 %v370
        %390 = vmatprep.subr.mxu0 0.0
        %391 = vmatpush1.msra.mxu0 %v371
        %392 = vmatprep.subr.mxu0 0.0
        %393 = vmatpush1.msra.mxu0 %v372
        %394 = vmatprep.subr.mxu0 0.0
        %395 = vmatpush1.msra.mxu0 %v373
        %396 = vmatprep.subr.mxu0 0.0
        %397 = vmatpush1.msra.mxu0 %v374
        %398 = vmatprep.subr.mxu0 0.0
        %399 = vmatpush1.msra.mxu0 %v375
        %400 = vmatprep.subr.mxu0 0.0
        %401 = vmatpush1.msra.mxu0 %v376
        %402 = vmatprep.subr.mxu0 0.0
        %403 = vmatpush1.msra.mxu0 %v377
        %404 = vmatprep.subr.mxu0 0.0
        %405 = vmatpush1.msra.mxu0 %v378
        %406 = vmatprep.subr.mxu0 0.0
        %407 = vmatpush1.msra.mxu0 %v379
        %408 = vmatprep.subr.mxu0 0.0
        %409 = vmatpush1.msra.mxu0 %v380
        %410 = vmatprep.subr.mxu0 0.0
        %411 = vmatpush1.msra.mxu0 %v381
        %412 = vmatprep.subr.mxu0 0.0
        %413 = vmatpush1.msra.mxu0 %v382
        %414 = vmatprep.subr.mxu0 0.0
        %415 = vmatpush1.msra.mxu0 %v383
        %416 = vmatprep.subr.mxu0 0.0
        %417 = vmatpush1.msra.mxu0 0.0
        %418 = vmatprep.subr.mxu0 0.0
        %419 = vmatpush1.msra.mxu0 0.0
        %420 = vmatprep.subr.mxu0 0.0
        %421 = vmatpush1.msra.mxu0 0.0
        %422 = vmatprep.subr.mxu0 0.0
        %423 = vmatpush1.msra.mxu0 0.0
        %424 = vmatprep.subr.mxu0 0.0
        %425 = vmatpush1.msra.mxu0 0.0
        %426 = vmatprep.subr.mxu0 0.0
        %427 = vmatpush1.msra.mxu0 0.0
        %428 = vmatprep.subr.mxu0 0.0
        %429 = vmatpush1.msra.mxu0 0.0
        %430 = vmatprep.subr.mxu0 0.0
        %431 = vmatpush1.msra.mxu0 0.0
        %432 = vmatprep.subr.mxu0 0.0
        %433 = vmatpush1.msra.mxu0 0.0
        %434 = vmatprep.subr.mxu0 0.0
        %435 = vmatpush1.msra.mxu0 0.0
        %436 = vmatprep.subr.mxu0 0.0
        %437 = vmatpush1.msra.mxu0 0.0
        %438 = vmatprep.subr.mxu0 0.0
        %439 = vmatpush1.msra.mxu0 0.0
        %440 = vmatprep.subr.mxu0 0.0
        %441 = vmatpush1.msra.mxu0 0.0
        %442 = vmatprep.subr.mxu0 0.0
        %443 = vmatpush1.msra.mxu0 0.0
        %444 = vmatprep.subr.mxu0 0.0
        %445 = vmatpush1.msra.mxu0 0.0
        %446 = vmatprep.subr.mxu0 0.0
        %447 = vmatpush1.msra.mxu0 0.0
        %448 = vmatprep.mubr.f32.mxu0 0.0
        %449 = vmatmul.mubr.f32.gmra.mrb[0].mxu0 %v366
        %v450 = vpop.f32.mrb[0].mxu0
        %v451 = vadd.f32 0.0, %v450
        %v452 = vpop.f32.mrb[0].mxu0
        %453 = vdwg.mxu0
        %v454 = vrot.slane %v451, 4
        %v455 = vadd.f32 %v451, %v454
        %v456 = vrot.slane %v455, 2
        %v457 = vadd.f32 %v455, %v456
        %v458 = vrot.slane %v457, 1
        %v459 = vadd.f32 %v457, %v458
        %v460 = vmul.f32 %v459, 0.125
        %v461 = vmul.f32 %v451, %v451
        %v462 = vrot.slane %v461, 4
        %v463 = vadd.f32 %v461, %v462
        %v464 = vrot.slane %v463, 2
        %v465 = vadd.f32 %v463, %v464
        %v466 = vrot.slane %v465, 1
        %v467 = vadd.f32 %v465, %v466
        %v468 = vmul.f32 %v467, 0.125
        %v469 = vmul.f32 %v460, %v460
        %v470 = vsub.f32 %v468, %v469
        %v471 = vmax.f32 %v470, 0.0
        %v472 = vadd.f32 %v471, 1e-05
        %v473 = vrsqrt.pop %v472
        %v474 = vmul.f32 %v236, %v473
        %v475 = vmul.f32 %v460, %v474
        %v477 = vrot.slane %v475, 7
        %v479 = vsub.f32 %v236, %v477
        %v480 = vlaneseq
        %v481 = vshrl.u32 %v480, 7
        %v482 = vsub.s32 2, %v481
        %v483 = vrot.slane %v474, %v482
        %v484 = vmul.f32 %v451, %v483
        %v485 = vlaneseq
        %v486 = vshrl.u32 %v485, 7
        %v487 = vsub.s32 3, %v486
        %v488 = vrot.slane %v479, %v487
        %v489 = vadd.f32 %v484, %v488
        %vm490 = vcmp.ge.f32.partialorder %v489, 0.0
        %v491 = vstv %s240
        %v492 = vmul.f32 %v491, %v489
        %v493 = vsel %vm490, %v489, %v492
        %v494 = vadd.f32 %v235, %v493
        %p495 = scmp.lt.s32.totalorder %s24, 2
        // Predicated region
        $region49: #{tpu_custom_call.1} parent=31 // pred_check
          %p496 = pneg %p495
        $region50: #{tpu_custom_call.1} parent=31 // pred_check_branch
          %498 = sbr.rel (%p496) target = $region52
        $region51: #{tpu_custom_call.1} parent=31 // pred_region
          %499 = vst [vmem:[#allocation10] sm:$0xff] %v494
        $region52: #{tpu_custom_call.1} parent=31 // pred_fallthru
          _
        %p500 = scmp.eq.s32.totalorder %s24, 2
        // Predicated region
        $region53: #{tpu_custom_call.1} parent=31 // pred_check
          %p501 = pneg %p500
        $region54: #{tpu_custom_call.1} parent=31 // pred_check_branch
          %503 = sbr.rel (%p501) target = $region56
        $region55: #{tpu_custom_call.1} parent=31 // pred_region
          %v504 = vld [vmem:[#allocation4] sm:$0xff]
          %v505 = vadd.f32 %v494, %v504
          %506 = vst [vmem:[#allocation10] sm:$0xff] %v505
        $region56: #{tpu_custom_call.1} parent=31 // pred_fallthru
          _
        // Predicated region
        $region57: #{tpu_custom_call.1} parent=31 // pred_check
          %p507 = pneg %p110
        $region58: #{tpu_custom_call.1} parent=31 // pred_check_branch
          %509 = sbr.rel (%p507) target = $region60
        $region59: #{tpu_custom_call.1} parent=31 // pred_region
          %s511 = ssub.s32 128, 128
          %512 = vsyncadd [#allocation6], %s511
          %s514 = sshll.u32 [#allocation10], 4
          %s515 = int_to_ptr.vmem [resolvable:$true] %s514
          %517 = dma.vmem_to_hbm [thread:$0]  %s515, 128, %s4, [#allocation6]
        $region60: #{tpu_custom_call.1} parent=31 // pred_fallthru
          _
        // Predicated region
        $region61: #{tpu_custom_call.1} parent=31 // pred_check
          %p518 = pneg %p110
        $region62: #{tpu_custom_call.1} parent=31 // pred_check_branch
          %520 = sbr.rel (%p518) target = $region64
        $region63: #{tpu_custom_call.1} parent=31 // pred_region
          %521 = dma.done [#allocation6], 128
        $region64: #{tpu_custom_call.1} parent=31 // pred_fallthru
          _
      $region32: #{tpu_custom_call.1} parent=5 // pred_fallthru
        _
      %p522 = scmp.le.s32.totalorder 2, %s19
      // Predicated region
      $region65: #{tpu_custom_call.1} parent=5 // pred_check
        %p523 = pneg %p522
      $region66: #{tpu_custom_call.1} parent=5 // pred_check_branch
        %525 = sbr.rel (%p523) target = $region68
      $region67: #{tpu_custom_call.1} parent=5 // pred_region
        %s526 = ssub.s32 %s19, 2
      $region68: #{tpu_custom_call.1} parent=5 // pred_fallthru
        _
    $region6: #{tpu_custom_call.1} parent=1 // loop_footer
      %s23 = sadd.s32 1, %s19
    $region7: #{tpu_custom_call.1} parent=1 // loop_footer_branch
      %18 = sbr.rel target = $region3
    $region8: #{tpu_custom_call.1} parent=1 // loop_exit
      _
    %527 = vsyncpa [#allocation5], 1
    %s528 = scalar_lea.sflag [#allocation5], 1
    %529 = vsyncpa %s528, 1
    %530 = vsyncpa [#allocation8], 1
    %s531 = scalar_lea.sflag [#allocation8], 1
    %532 = vsyncpa %s531, 1
    %533 = vsyncpa [#allocation6], 1
    %s534 = scalar_lea.sflag [#allocation6], 1
    %535 = vsyncpa %s534, 1

</llo_original>
